<compile_context>
chip_gen: v7x
topology: tpu7x:2x2x1
jax: 0.10.0
libtpu: 0.0.40
codegen_flags: <defaults>
</compile_context>

<pallas_src>
import functools

import jax
import jax.numpy as jnp
from jax.experimental import pallas as pl
from jax.experimental.pallas import tpu as pltpu

_LANE = 128
_SUBLANE = 8


def _round_up(x: int, m: int) -> int:
    return ((x + m - 1) // m) * m


def _mc_dropout_kernel(seed_ref, x_ref, w1_ref, b1_ref, w2_ref, b2_ref, o_ref,
                       *, drop_threshold: int, tile_b: int, h_pad: int):
    # layer1: x @ W1 + b1   (bf16 MXU inputs, f32 accumulation)
    h = jnp.dot(x_ref[...], w1_ref[...], preferred_element_type=jnp.float32)
    h = h + b1_ref[...]

    # activation  # TODO(synk): `activation` is a ctor arg of the module; ReLU assumed.
    h = jnp.maximum(h, 0.0)

    # MC dropout: always applied (training=True in the reference).
    if drop_threshold > 0:
        # Counter-based hash keyed on (seed, sample, global row, col).
        # Row/seed/sample mixing happens on a (tile_b,1) column and the column
        # mixing on a (1,h_pad) row; only the XOR-broadcast + finalizer runs at
        # full tile width.  Integer threshold compare; the 1/(1-p) keep-scale
        # is folded into W2 by the wrapper.
        row = (jax.lax.broadcasted_iota(jnp.int32, (tile_b, 1), 0)
               + pl.program_id(0) * tile_b).astype(jnp.uint32)
        col = jax.lax.broadcasted_iota(jnp.int32, (1, h_pad), 1).astype(jnp.uint32)
        s = seed_ref[0].astype(jnp.uint32)
        sample = pl.program_id(1).astype(jnp.uint32)

        row_mix = (row * jnp.uint32(0x9E3779B1)
                   ^ (s * jnp.uint32(0xC2B2AE3D))
                   ^ (sample * jnp.uint32(0x27D4EB2F)))          # (tile_b, 1)
        col_mix = col * jnp.uint32(0x85EBCA77)                   # (1, h_pad)
        z = row_mix ^ col_mix                                    # (tile_b, h_pad)
        # One full murmur3-style finalizer round (do not weaken further).
        z = z ^ (z >> 16)
        z = z * jnp.uint32(0x85EBCA6B)
        z = z ^ (z >> 13)
        z = z * jnp.uint32(0xC2B2AE35)
        z = z ^ (z >> 16)
        keep = z >= jnp.uint32(drop_threshold)
        h = jnp.where(keep, h, jnp.float32(0.0))

    # layer2: h @ W2' + b2   (W2' already carries the 1/(1-p) scale)
    out = jnp.dot(h.astype(w2_ref.dtype), w2_ref[...],
                  preferred_element_type=jnp.float32) + b2_ref[...]
    o_ref[...] = out.astype(o_ref.dtype)


def _prepare_params(w1, b1, w2, b2, drop_prob):
    """Pad hidden dim to a lane-dense 128 multiple, fold dropout scale into W2,
    cast matmul operands to bf16 (biases stay f32)."""
    input_dim, no_units = w1.shape
    output_dim = w2.shape[1]
    h_pad = _round_up(no_units, _LANE)

    scale = 1.0 if float(drop_prob) == 0.0 else 1.0 / (1.0 - float(drop_prob))
    w2_eff = w2.astype(jnp.float32) * jnp.float32(scale)

    w1_p = (jnp.zeros((input_dim, h_pad), jnp.float32)
            .at[:, :no_units].set(w1).astype(jnp.bfloat16))
    b1_p = jnp.zeros((1, h_pad), jnp.float32).at[0, :no_units].set(b1)
    w2_p = (jnp.zeros((h_pad, output_dim), jnp.float32)
            .at[:no_units, :].set(w2_eff).astype(jnp.bfloat16))
    b2_p = b2.astype(jnp.float32).reshape(1, output_dim)
    return w1_p, b1_p, w2_p, b2_p, h_pad, output_dim


def _mc_dropout_pallas(x2d, w1_p, b1_p, w2_p, b2_p, seed, drop_threshold,
                       n_samples, tile_b, h_pad, out_cols):
    padded_rows, input_dim = x2d.shape
    n_tiles = padded_rows // tile_b
    seed_arr = jnp.asarray([seed], dtype=jnp.int32)

    kernel = functools.partial(
        _mc_dropout_kernel, drop_threshold=drop_threshold,
        tile_b=tile_b, h_pad=h_pad)

    return pl.pallas_call(
        kernel,
        out_shape=jax.ShapeDtypeStruct((n_samples, padded_rows, out_cols),
                                       jnp.float32),
        grid_spec=pltpu.PrefetchScalarGridSpec(
            num_scalar_prefetch=1,
            # Row tiles outermost, MC samples innermost: the x block index is
            # constant across the sample axis so the x tile is DMA'd once per
            # row tile and reused for every sample.  Weights/biases have
            # constant index maps and stay VMEM-resident for the whole grid.
            grid=(n_tiles, n_samples),
            in_specs=[
                pl.BlockSpec((tile_b, input_dim), lambda i, s, seed: (i, 0)),
                pl.BlockSpec((input_dim, h_pad), lambda i, s, seed: (0, 0)),
                pl.BlockSpec((1, h_pad), lambda i, s, seed: (0, 0)),
                pl.BlockSpec((h_pad, out_cols), lambda i, s, seed: (0, 0)),
                pl.BlockSpec((1, out_cols), lambda i, s, seed: (0, 0)),
            ],
            out_specs=pl.BlockSpec((None, tile_b, out_cols),
                                   lambda i, s, seed: (s, i, 0)),
        ),
        compiler_params=pltpu.CompilerParams(
            dimension_semantics=("parallel", "parallel"),
            vmem_limit_bytes=32 * 1024 * 1024,   # safe on v7x (64 MiB/TC)
        ),
    )(seed_arr, x2d, w1_p, b1_p, w2_p, b2_p)


def mc_dropout_predict(x, w1, b1, w2, b2, seed, drop_prob, n_samples=1, *,
                       tile_b=None):
    """MC-dropout forward with `n_samples` independent dropout masks.

    x : (..., input_dim)          -> flattened to (-1, input_dim) like the reference
    w1: (input_dim, no_units)     (nn.Linear weight, pre-transposed)
    b1: (no_units,)
    w2: (no_units, output_dim)    (nn.Linear weight, pre-transposed)
    b2: (output_dim,)
    Returns (n_samples, batch, output_dim).
    """
    assert 0.0 <= float(drop_prob) < 1.0, "drop_prob must be in [0, 1)"
    input_dim = w1.shape[0]

    x2d = x.reshape(-1, input_dim).astype(jnp.float32)
    n_rows = x2d.shape[0]

    # Batch tiling: large default tile to amortize per-grid-step overhead.
    if tile_b is None:
        tile_b = min(2048, _round_up(n_rows, _SUBLANE))
    tile_b = max(_SUBLANE, _round_up(int(tile_b), _SUBLANE))
    padded_rows = _round_up(max(n_rows, tile_b), tile_b)
    if padded_rows != n_rows:
        x2d = jnp.pad(x2d, ((0, padded_rows - n_rows), (0, 0)))
    x2d = x2d.astype(jnp.bfloat16)   # MXU-native; halves x DMA bytes

    w1_p, b1_p, w2_p, b2_p, h_pad, output_dim = _prepare_params(
        w1, b1, w2, b2, drop_prob)
    drop_threshold = min(int(round(float(drop_prob) * 2.0 ** 32)), 2 ** 32 - 1)

    out = _mc_dropout_pallas(x2d, w1_p, b1_p, w2_p, b2_p, seed, drop_threshold,
                             n_samples, tile_b, h_pad, output_dim)
    if padded_rows != n_rows:
        out = out[:, :n_rows, :]
    return out


def mc_dropout_forward(x, w1, b1, w2, b2, seed, drop_prob, *, tile_b=None):
    """Single forward pass of MC_Dropout_Model (dropout always on, ReLU)."""
    return mc_dropout_predict(x, w1, b1, w2, b2, seed, drop_prob,
                              n_samples=1, tile_b=tile_b)[0]


if __name__ == "__main__":
    # Small shapes consistent with the module.
    batch, input_dim, no_units, output_dim = 32, 4, 32, 1
    drop_prob = 0.2
    init_log_noise = -1.0  # module parameter, unused in forward()

    key = jax.random.PRNGKey(0)
    kx, k1, kb1, k2, kb2 = jax.random.split(key, 5)

    x = jax.random.normal(kx, (batch, input_dim), dtype=jnp.float32)
    # Deterministic param init (shapes follow nn.Linear; passed pre-transposed).
    w1 = jax.random.normal(k1, (input_dim, no_units), dtype=jnp.float32) * 0.1
    b1 = jax.random.normal(kb1, (no_units,), dtype=jnp.float32) * 0.1
    w2 = jax.random.normal(k2, (no_units, output_dim), dtype=jnp.float32) * 0.1
    b2 = jax.random.normal(kb2, (output_dim,), dtype=jnp.float32) * 0.1
    log_noise = jnp.asarray([init_log_noise], dtype=jnp.float32)  # unused in forward

    # 1) Deterministic path (drop_prob=0) vs references.
    out_nodrop = jax.block_until_ready(
        mc_dropout_forward(x, w1, b1, w2, b2, seed=0, drop_prob=0.0))
    assert out_nodrop.shape == (batch, output_dim)
    # bf16-matmul / f32-accumulation reference (same math as the kernel).
    h_ref = jnp.dot(x.astype(jnp.bfloat16), w1.astype(jnp.bfloat16),
                    preferred_element_type=jnp.float32) + b1
    h_ref = jnp.maximum(h_ref, 0.0)
    ref_bf16 = jnp.dot(h_ref.astype(jnp.bfloat16), w2.astype(jnp.bfloat16),
                       preferred_element_type=jnp.float32) + b2
    assert jnp.allclose(out_nodrop, ref_bf16, atol=1e-4, rtol=1e-4)
    # Loose sanity check against the full-f32 reference.
    ref_f32 = jnp.maximum(x @ w1 + b1, 0.0) @ w2 + b2
    assert jnp.allclose(out_nodrop, ref_f32, atol=5e-2, rtol=5e-2)

    # 2) MC dropout path: finite, reproducible for the same seed, and invariant
    #    to the batch tiling (mask is keyed on the global row index).
    out_a = jax.block_until_ready(
        mc_dropout_forward(x, w1, b1, w2, b2, seed=1234, drop_prob=drop_prob))
    out_b = jax.block_until_ready(
        mc_dropout_forward(x, w1, b1, w2, b2, seed=1234, drop_prob=drop_prob,
                           tile_b=8))  # 4 grid steps
    out_c = jax.block_until_ready(
        mc_dropout_forward(x, w1, b1, w2, b2, seed=4321, drop_prob=drop_prob))
    assert out_a.shape == (batch, output_dim)
    assert bool(jnp.all(jnp.isfinite(out_a)))
    assert jnp.allclose(out_a, out_b, atol=1e-6, rtol=1e-6)
    assert not bool(jnp.allclose(out_a, out_c))  # different seed -> different mask

    # 3) Fused MC samples (sample axis is a grid axis; x not replicated in HBM).
    samples = jax.block_until_ready(
        mc_dropout_predict(x, w1, b1, w2, b2, seed=7, drop_prob=drop_prob,
                           n_samples=4))
    assert samples.shape == (4, batch, output_dim)
    assert bool(jnp.all(jnp.isfinite(samples)))
    # Different samples use independent masks (keyed on the sample grid index).
    assert not bool(jnp.allclose(samples[0], samples[1]))

    print("KERNEL_OK")
</pallas_src>

<mosaic_0001>
module attributes {stable_mosaic.version = 11 : i64} {
  func.func @_mc_dropout_kernel(%arg0: i32, %arg1: i32, %arg2: memref<1xi32, #tpu.memory_space<smem>>, %arg3: memref<32x4xbf16, #tpu.memory_space<vmem>>, %arg4: memref<4x128xbf16, #tpu.memory_space<vmem>>, %arg5: memref<1x128xf32, #tpu.memory_space<vmem>>, %arg6: memref<128x1xbf16, #tpu.memory_space<vmem>>, %arg7: memref<1x1xf32, #tpu.memory_space<vmem>>, %arg8: memref<1x32x1xf32, #tpu.memory_space<vmem>>) attributes {dimension_semantics = [#tpu.dimension_semantics<parallel>, #tpu.dimension_semantics<parallel>], iteration_bounds = array<i64: 1, 1>, scalar_prefetch = 1 : i64, scratch_operands = 0 : i64, tpu.core_type = #tpu.core_type<tc>, window_params = [{transform_indices = @transform_0, window_bounds = array<i64: 32, 4>}, {pipeline_mode = #tpu.pipeline_mode<synchronous>, transform_indices = @transform_1, window_bounds = array<i64: 4, 128>}, {pipeline_mode = #tpu.pipeline_mode<synchronous>, transform_indices = @transform_2, window_bounds = array<i64: 1, 128>}, {pipeline_mode = #tpu.pipeline_mode<synchronous>, transform_indices = @transform_3, window_bounds = array<i64: 128, 1>}, {pipeline_mode = #tpu.pipeline_mode<synchronous>, transform_indices = @transform_4, window_bounds = array<i64: 1, 1>}, {transform_indices = @transform_5, window_bounds = array<i64: 1, 32, 1>}]} {
    %c0 = arith.constant 0 : index
    %c0_0 = arith.constant 0 : index
    %0 = vector.load %arg3[%c0, %c0_0] : memref<32x4xbf16, #tpu.memory_space<vmem>>, vector<32x4xbf16>
    %c0_1 = arith.constant 0 : index
    %c0_2 = arith.constant 0 : index
    %1 = vector.load %arg4[%c0_1, %c0_2] : memref<4x128xbf16, #tpu.memory_space<vmem>>, vector<4x128xbf16>
    %cst = arith.constant dense<0.000000e+00> : vector<32x128xf32>
    %2 = tpu.matmul %0, %1, %cst {dimension_numbers = #tpu.dot_dimension_numbers<[1], [0], [0], [1], [0, 0, 1, 1], [], []>} : vector<32x4xbf16>, vector<4x128xbf16>, vector<32x128xf32> -> vector<32x128xf32>
    %c0_3 = arith.constant 0 : index
    %c0_4 = arith.constant 0 : index
    %3 = vector.load %arg5[%c0_3, %c0_4] : memref<1x128xf32, #tpu.memory_space<vmem>>, vector<1x128xf32>
    %4 = vector.broadcast %3 : vector<1x128xf32> to vector<32x128xf32>
    %5 = arith.addf %2, %4 : vector<32x128xf32>
    %cst_5 = arith.constant 0.000000e+00 : f32
    %6 = vector.broadcast %cst_5 : f32 to vector<32x128xf32>
    %7 = arith.maximumf %5, %6 : vector<32x128xf32>
    %8 = arith.truncf %7 : vector<32x128xf32> to vector<32x128xbf16>
    %c0_6 = arith.constant 0 : index
    %c0_7 = arith.constant 0 : index
    %9 = vector.load %arg6[%c0_6, %c0_7] : memref<128x1xbf16, #tpu.memory_space<vmem>>, vector<128x1xbf16>
    %cst_8 = arith.constant dense<0.000000e+00> : vector<32x1xf32>
    %10 = tpu.matmul %8, %9, %cst_8 {dimension_numbers = #tpu.dot_dimension_numbers<[1], [0], [0], [1], [0, 0, 1, 1], [], []>} : vector<32x128xbf16>, vector<128x1xbf16>, vector<32x1xf32> -> vector<32x1xf32>
    %c0_9 = arith.constant 0 : index
    %c0_10 = arith.constant 0 : index
    %11 = vector.load %arg7[%c0_9, %c0_10] : memref<1x1xf32, #tpu.memory_space<vmem>>, vector<1x1xf32>
    %12 = vector.broadcast %11 : vector<1x1xf32> to vector<32x1xf32>
    %13 = arith.addf %10, %12 : vector<32x1xf32>
    %c0_11 = arith.constant 0 : index
    %c0_12 = arith.constant 0 : index
    %c0_13 = arith.constant 0 : index
    %14 = vector.load %arg8[%c0_11, %c0_12, %c0_13] : memref<1x32x1xf32, #tpu.memory_space<vmem>>, vector<1x32x1xf32>
    %15 = vector.shape_cast %14 : vector<1x32x1xf32> to vector<32x1xf32>
    %16 = vector.shape_cast %13 : vector<32x1xf32> to vector<1x32x1xf32>
    tpu.vector_store %arg8[%c0_11, %c0_12, %c0_13], %16 {strides = array<i32>} : memref<1x32x1xf32, #tpu.memory_space<vmem>>, vector<1x32x1xf32>,
    return
  }
  func.func @transform_0(%arg0: i32, %arg1: i32, %arg2: memref<1xi32, #tpu.memory_space<smem>>) -> (i32, i32) {
    %c0_i32 = arith.constant 0 : i32
    %c0_i32_0 = arith.constant 0 : i32
    return %arg0, %c0_i32 : i32, i32
  }
  func.func @transform_1(%arg0: i32, %arg1: i32, %arg2: memref<1xi32, #tpu.memory_space<smem>>) -> (i32, i32) {
    %c0_i32 = arith.constant 0 : i32
    %c0_i32_0 = arith.constant 0 : i32
    %c0_i32_1 = arith.constant 0 : i32
    return %c0_i32, %c0_i32_0 : i32, i32
  }
  func.func @transform_2(%arg0: i32, %arg1: i32, %arg2: memref<1xi32, #tpu.memory_space<smem>>) -> (i32, i32) {
    %c0_i32 = arith.constant 0 : i32
    %c0_i32_0 = arith.constant 0 : i32
    %c0_i32_1 = arith.constant 0 : i32
    return %c0_i32, %c0_i32_0 : i32, i32
  }
  func.func @transform_3(%arg0: i32, %arg1: i32, %arg2: memref<1xi32, #tpu.memory_space<smem>>) -> (i32, i32) {
    %c0_i32 = arith.constant 0 : i32
    %c0_i32_0 = arith.constant 0 : i32
    %c0_i32_1 = arith.constant 0 : i32
    return %c0_i32, %c0_i32_0 : i32, i32
  }
  func.func @transform_4(%arg0: i32, %arg1: i32, %arg2: memref<1xi32, #tpu.memory_space<smem>>) -> (i32, i32) {
    %c0_i32 = arith.constant 0 : i32
    %c0_i32_0 = arith.constant 0 : i32
    %c0_i32_1 = arith.constant 0 : i32
    return %c0_i32, %c0_i32_0 : i32, i32
  }
  func.func @transform_5(%arg0: i32, %arg1: i32, %arg2: memref<1xi32, #tpu.memory_space<smem>>) -> (i32, i32, i32) {
    %c0_i32 = arith.constant 0 : i32
    %c0_i32_0 = arith.constant 0 : i32
    return %arg1, %arg0, %c0_i32 : i32, i32, i32
  }
}

</mosaic_0001>

<llo_original>
// kernel: tpu_custom_call.1
$region0: #{tpu_custom_call.1}
  #allocation0 [shape = 'u32[]', space=smem, size = 0x4, offset = 0x4, fixed_abs, tag = 'smem constant byte address 0x4 - core index']
  #allocation1 [shape = 'u32[144,128]{1,0:T(1,128)}', space=vmem, size = 0x12000, scoped, tag = 'internal scratch']
  #allocation2 [shape = 's32[1]{0}', space=sflag, size = 0x4, scoped, tag = 'scoped memory for tpu_custom_call.1']
  #allocation3 [shape = 's32[1]{0:T(128)S(6)}', space=smem, size = 0x200, scoped, tag = 'prefetched SMEM operand 0']
  #allocation4 [shape = 'f32[1,1]{1,0:T(1,128)S(1)}', space=vmem, size = 0x200, scoped, tag = 'scoped memory for tpu_custom_call.1']
  %s0 = inlined_call_operand.<no memory space> [shape: s32[1], index: 0, kind: input, shape index: {}]
  %s1 = inlined_call_operand.vmem [shape: bf16[32,4], index: 1, kind: input, shape index: {}]
  %s2 = inlined_call_operand.vmem [shape: bf16[4,128], index: 2, kind: input, shape index: {}]
  %s3 = inlined_call_operand.vmem [shape: f32[1,128], index: 3, kind: input, shape index: {}]
  %s4 = inlined_call_operand.vmem [shape: bf16[128,1], index: 4, kind: input, shape index: {}]
  %s5 = inlined_call_operand.<no memory space> [shape: f32[1,1], index: 5, kind: input, shape index: {}]
  %s6 = inlined_call_operand.vmem [shape: f32[1,32,1], index: 6, kind: output, shape index: {}]
  %s7 = sld [smem:[#allocation0]]
  $region30: #{tpu_custom_call.1} parent=0
    _
  %s9 = ssub.s32 1, %s7
  %s10 = scalar_select 0, %s9, %s7
  %11 = sst [smem:[#allocation3]] %s0
  %v12 = vstv %s5
  %13 = vst [vmem:[#allocation4] sm:$0x1] %v12
  // Predicated region
  $region2: #{tpu_custom_call.1} parent=0 // pred_check
    _
  $region3: #{tpu_custom_call.1} parent=0 // pred_check_branch
    %15 = sbr.rel (0) target = $region5
  $region4: #{tpu_custom_call.1} parent=0 // pred_region
    _
  $region5: #{tpu_custom_call.1} parent=0 // pred_fallthru
    _
  // Predicated region
  $region6: #{tpu_custom_call.1} parent=0 // pred_check
    _
  $region7: #{tpu_custom_call.1} parent=0 // pred_check_branch
    %17 = sbr.rel (0) target = $region9
  $region8: #{tpu_custom_call.1} parent=0 // pred_region
    _
  $region9: #{tpu_custom_call.1} parent=0 // pred_fallthru
    _
  // Predicated region
  $region10: #{tpu_custom_call.1} parent=0 // pred_check
    _
  $region11: #{tpu_custom_call.1} parent=0 // pred_check_branch
    %19 = sbr.rel (0) target = $region13
  $region12: #{tpu_custom_call.1} parent=0 // pred_region
    _
  $region13: #{tpu_custom_call.1} parent=0 // pred_fallthru
    _
  // Predicated region
  $region14: #{tpu_custom_call.1} parent=0 // pred_check
    _
  $region15: #{tpu_custom_call.1} parent=0 // pred_check_branch
    %21 = sbr.rel (0) target = $region17
  $region16: #{tpu_custom_call.1} parent=0 // pred_region
    _
  $region17: #{tpu_custom_call.1} parent=0 // pred_fallthru
    _
  // Predicated region
  $region18: #{tpu_custom_call.1} parent=0 // pred_check
    _
  $region19: #{tpu_custom_call.1} parent=0 // pred_check_branch
    %23 = sbr.rel (0) target = $region21
  $region20: #{tpu_custom_call.1} parent=0 // pred_region
    _
  $region21: #{tpu_custom_call.1} parent=0 // pred_fallthru
    _
  %v25 = vld [vmem:[%s1] sm:$0xf]
  %v26 = vld [vmem:[%s1 + $0x4] sm:$0xf]
  %v27 = vld [vmem:[%s1 + $0x8] sm:$0xf]
  %v28 = vld [vmem:[%s1 + $0xc] sm:$0xf]
  %v29 = vld [vmem:[%s2] sm:$0x3]
  %v30 = vld [vmem:[%s3] sm:$0x1]
  %v32 = vlaneseq
  %v33 = vshrl.u32 %v32, 7
  %v34 = vsub.s32 0, %v33
  %v35 = vrot.slane %v30, %v34
  %v41 = vunpack.c.l.b16 %v25
  %v42 = vunpack.c.l.b16 %v26
  %v43 = vunpack.c.l.b16 %v27
  %v44 = vunpack.c.l.b16 %v28
  %v45 = vpack.c.b16 %v42, %v41
  %v46 = vpack.c.b16 %v44, %v43
  %vm47 = vcmask 31744
  %v49 = vsel %vm47, %v45, 0
  %v52 = vsel %vm47, %v46, 0
  %vm54 = vcmask 1041408
  %v56 = vsel %vm54, %v29, 0
  %58 = vmatprep.subr.bf16.mxu0 0
  %59 = vmatpush1.bf16.msra.mxu0 %v56
  %60 = vmatprep.subr.bf16.mxu0 0
  %61 = vmatpush1.bf16.msra.mxu0 0
  %62 = vmatprep.subr.bf16.mxu0 0
  %63 = vmatpush1.bf16.msra.mxu0 0
  %64 = vmatprep.subr.bf16.mxu0 0
  %65 = vmatpush1.bf16.msra.mxu0 0
  %66 = vmatprep.subr.bf16.mxu0 0
  %67 = vmatpush1.bf16.msra.mxu0 0
  %68 = vmatprep.subr.bf16.mxu0 0
  %69 = vmatpush1.bf16.msra.mxu0 0
  %70 = vmatprep.subr.bf16.mxu0 0
  %71 = vmatpush1.bf16.msra.mxu0 0
  %72 = vmatprep.subr.bf16.mxu0 0
  %73 = vmatpush1.bf16.msra.mxu0 0
  %74 = vmatprep.subr.bf16.mxu0 0
  %75 = vmatpush1.bf16.msra.mxu0 0
  %76 = vmatprep.subr.bf16.mxu0 0
  %77 = vmatpush1.bf16.msra.mxu0 0
  %78 = vmatprep.subr.bf16.mxu0 0
  %79 = vmatpush1.bf16.msra.mxu0 0
  %80 = vmatprep.subr.bf16.mxu0 0
  %81 = vmatpush1.bf16.msra.mxu0 0
  %82 = vmatprep.subr.bf16.mxu0 0
  %83 = vmatpush1.bf16.msra.mxu0 0
  %84 = vmatprep.subr.bf16.mxu0 0
  %85 = vmatpush1.bf16.msra.mxu0 0
  %86 = vmatprep.subr.bf16.mxu0 0
  %87 = vmatpush1.bf16.msra.mxu0 0
  %88 = vmatprep.subr.bf16.mxu0 0
  %89 = vmatpush1.bf16.msra.mxu0 0
  %90 = vmatprep.mubr.bf16.mxu0 0
  %91 = vmatmul.mubr.bf16.gmra.mrb[0].mxu0 %v49
  %v92 = vpop.f32.mrb[0].mxu0
  %v93 = vadd.f32 %v35, %v92
  %v94 = vpop.f32.mrb[0].mxu0
  %v95 = vpop.f32.mrb[0].mxu0
  %v96 = vadd.f32 %v35, %v95
  %v97 = vpop.f32.mrb[0].mxu0
  %98 = vmatprep.mubr.bf16.mxu0 0
  %99 = vmatmul.mubr.bf16.gmra.mrb[0].mxu0 %v52
  %v100 = vpop.f32.mrb[0].mxu0
  %v101 = vadd.f32 %v35, %v100
  %v102 = vpop.f32.mrb[0].mxu0
  %v103 = vpop.f32.mrb[0].mxu0
  %v104 = vadd.f32 %v35, %v103
  %v105 = vpop.f32.mrb[0].mxu0
  %106 = vdwg.mxu0
  %v107 = vmax.f32 %v93, 0.0
  %v108 = vmax.f32 %v96, 0.0
  %v109 = vmax.f32 %v101, 0.0
  %v110 = vmax.f32 %v104, 0.0
  %v111 = vpack.c.bf16 %v108, %v107
  %v112 = vpack.c.bf16 %v110, %v109
  %v113 = vld [vmem:[%s4] sm:$0xf]
  %v114 = vld [vmem:[%s4 + $0x4] sm:$0xf]
  %v115 = vld [vmem:[%s4 + $0x8] sm:$0xf]
  %v116 = vld [vmem:[%s4 + $0xc] sm:$0xf]
  %v117 = vld [vmem:[%s4 + $0x10] sm:$0xf]
  %v118 = vld [vmem:[%s4 + $0x14] sm:$0xf]
  %v119 = vld [vmem:[%s4 + $0x18] sm:$0xf]
  %v120 = vld [vmem:[%s4 + $0x1c] sm:$0xf]
  %v121 = vld [vmem:[%s4 + $0x20] sm:$0xf]
  %v122 = vld [vmem:[%s4 + $0x24] sm:$0xf]
  %v123 = vld [vmem:[%s4 + $0x28] sm:$0xf]
  %v124 = vld [vmem:[%s4 + $0x2c] sm:$0xf]
  %v125 = vld [vmem:[%s4 + $0x30] sm:$0xf]
  %v126 = vld [vmem:[%s4 + $0x34] sm:$0xf]
  %v127 = vld [vmem:[%s4 + $0x38] sm:$0xf]
  %v128 = vld [vmem:[%s4 + $0x3c] sm:$0xf]
  %v129 = vld [vmem:[#allocation4] sm:$0x1]
  %v131 = vlaneseq
  %v132 = vshrl.u32 %v131, 7
  %v133 = vsub.s32 0, %v132
  %v134 = vrot.slane %v129, %v133
  %v152 = vunpack.c.l.b16 %v113
  %v153 = vunpack.c.l.b16 %v114
  %v154 = vunpack.c.l.b16 %v115
  %v155 = vunpack.c.l.b16 %v116
  %v156 = vunpack.c.l.b16 %v117
  %v157 = vunpack.c.l.b16 %v118
  %v158 = vunpack.c.l.b16 %v119
  %v159 = vunpack.c.l.b16 %v120
  %v160 = vunpack.c.l.b16 %v121
  %v161 = vunpack.c.l.b16 %v122
  %v162 = vunpack.c.l.b16 %v123
  %v163 = vunpack.c.l.b16 %v124
  %v164 = vunpack.c.l.b16 %v125
  %v165 = vunpack.c.l.b16 %v126
  %v166 = vunpack.c.l.b16 %v127
  %v167 = vunpack.c.l.b16 %v128
  %v168 = vpack.c.b16 %v153, %v152
  %v169 = vpack.c.b16 %v155, %v154
  %v170 = vpack.c.b16 %v157, %v156
  %v171 = vpack.c.b16 %v159, %v158
  %v172 = vpack.c.b16 %v161, %v160
  %v173 = vpack.c.b16 %v163, %v162
  %v174 = vpack.c.b16 %v165, %v164
  %v175 = vpack.c.b16 %v167, %v166
  %184 = vmatprep.subr.bf16.mxu0 0
  %185 = vmatpush1.bf16.msra.mxu0 %v168
  %186 = vmatprep.subr.bf16.mxu0 0
  %187 = vmatpush1.bf16.msra.mxu0 %v169
  %188 = vmatprep.subr.bf16.mxu0 0
  %189 = vmatpush1.bf16.msra.mxu0 %v170
  %190 = vmatprep.subr.bf16.mxu0 0
  %191 = vmatpush1.bf16.msra.mxu0 %v171
  %192 = vmatprep.subr.bf16.mxu0 0
  %193 = vmatpush1.bf16.msra.mxu0 %v172
  %194 = vmatprep.subr.bf16.mxu0 0
  %195 = vmatpush1.bf16.msra.mxu0 %v173
  %196 = vmatprep.subr.bf16.mxu0 0
  %197 = vmatpush1.bf16.msra.mxu0 %v174
  %198 = vmatprep.subr.bf16.mxu0 0
  %199 = vmatpush1.bf16.msra.mxu0 %v175
  %200 = vmatprep.subr.bf16.mxu0 0
  %201 = vmatpush1.bf16.msra.mxu0 0
  %202 = vmatprep.subr.bf16.mxu0 0
  %203 = vmatpush1.bf16.msra.mxu0 0
  %204 = vmatprep.subr.bf16.mxu0 0
  %205 = vmatpush1.bf16.msra.mxu0 0
  %206 = vmatprep.subr.bf16.mxu0 0
  %207 = vmatpush1.bf16.msra.mxu0 0
  %208 = vmatprep.subr.bf16.mxu0 0
  %209 = vmatpush1.bf16.msra.mxu0 0
  %210 = vmatprep.subr.bf16.mxu0 0
  %211 = vmatpush1.bf16.msra.mxu0 0
  %212 = vmatprep.subr.bf16.mxu0 0
  %213 = vmatpush1.bf16.msra.mxu0 0
  %214 = vmatprep.subr.bf16.mxu0 0
  %215 = vmatpush1.bf16.msra.mxu0 0
  %216 = vmatprep.mubr.bf16.mxu0 0
  %217 = vmatmul.mubr.bf16.gmra.mrb[0].mxu0 %v111
  %v218 = vpop.f32.mrb[0].mxu0
  %v219 = vadd.f32 %v134, %v218
  %v220 = vpop.f32.mrb[0].mxu0
  %v221 = vpop.f32.mrb[0].mxu0
  %v222 = vadd.f32 %v134, %v221
  %v223 = vpop.f32.mrb[0].mxu0
  %224 = vmatprep.mubr.bf16.mxu0 0
  %225 = vmatmul.mubr.bf16.gmra.mrb[0].mxu0 %v112
  %v226 = vpop.f32.mrb[0].mxu0
  %v227 = vadd.f32 %v134, %v226
  %v228 = vpop.f32.mrb[0].mxu0
  %v229 = vpop.f32.mrb[0].mxu0
  %v230 = vadd.f32 %v134, %v229
  %v231 = vpop.f32.mrb[0].mxu0
  %232 = vdwg.mxu0
  %vm233 = vcmask 7168
  %234 = vst.msk [vmem:[%s6] sm:$0xff] %vm233, %v219
  %235 = vst.msk [vmem:[%s6 + $0x8] sm:$0xff] %vm233, %v222
  %236 = vst.msk [vmem:[%s6 + $0x10] sm:$0xff] %vm233, %v227
  %237 = vst.msk [vmem:[%s6 + $0x18] sm:$0xff] %vm233, %v230
  // Predicated region
  $region22: #{tpu_custom_call.1} parent=0 // pred_check
    _
  $region23: #{tpu_custom_call.1} parent=0 // pred_check_branch
    %239 = sbr.rel (0) target = $region25
  $region24: #{tpu_custom_call.1} parent=0 // pred_region
    _
  $region25: #{tpu_custom_call.1} parent=0 // pred_fallthru
    _
  // Predicated region
  $region26: #{tpu_custom_call.1} parent=0 // pred_check
    _
  $region27: #{tpu_custom_call.1} parent=0 // pred_check_branch
    %241 = sbr.rel (0) target = $region29
  $region28: #{tpu_custom_call.1} parent=0 // pred_region
    _
  $region29: #{tpu_custom_call.1} parent=0 // pred_fallthru
    _

</llo_original>
